<compile_context>
chip_gen: v6e
topology: v6e:2x2x1
jax: 0.10.0
libtpu: 0.0.40
codegen_flags: <defaults>
</compile_context>

<pallas_src>
import jax
import jax.numpy as jnp
from jax.experimental import pallas as pl
from jax.experimental.pallas import tpu as pltpu


def _round_up(x, m):
    return ((x + m - 1) // m) * m


# ------------------------------------------------------------------
# Pallas kernels
# ------------------------------------------------------------------

def _linear_bias_kernel(x_ref, w_ref, b_ref, o_ref):
    # bf16 MXU inputs, f32 accumulation, f32 bias epilogue.
    x = x_ref[...].astype(jnp.bfloat16)
    acc = jnp.dot(x, w_ref[...], preferred_element_type=jnp.float32)
    o_ref[...] = (acc + b_ref[...]).astype(o_ref.dtype)


def _linear_nobias_kernel(x_ref, w_ref, o_ref):
    x = x_ref[...].astype(jnp.bfloat16)
    acc = jnp.dot(x, w_ref[...], preferred_element_type=jnp.float32)
    o_ref[...] = acc.astype(o_ref.dtype)


# ------------------------------------------------------------------
# Wrapper
# ------------------------------------------------------------------

def _pick_tm(M):
    """Row-tile size: large tiles for HBM/pipeline efficiency, but keep >= 2
    'parallel' grid steps when M allows (v7x megacore). Second-minor block dim
    must be a multiple of 8 or equal the full M extent."""
    if M <= 8:
        return M                       # single (possibly sub-8) tile == full extent
    return min(512, _round_up((M + 1) // 2, 8))


def linear_forward(x, w_kn_bf16, b=None, *, tm=None):
    """y = x @ w + b.

    x:          (M, K) float32 activations.
    w_kn_bf16:  (K, N) bfloat16 weight, i.e. PyTorch weight (N, K) pre-transposed
                and pre-cast once at init (no per-call copies).
    b:          (N,) float32 bias or None.
    """
    M, K = x.shape
    K2, N = w_kn_bf16.shape
    assert K == K2, (K, K2)

    TM = tm if tm is not None else _pick_tm(M)
    grid = (pl.cdiv(M, TM),)

    x_spec = pl.BlockSpec((TM, K), lambda i: (i, 0))     # K block == full extent
    w_spec = pl.BlockSpec((K, N), lambda i: (0, 0))      # weight resident across grid
    o_spec = pl.BlockSpec((TM, N), lambda i: (i, 0))
    out_shape = jax.ShapeDtypeStruct((M, N), jnp.float32)
    cparams = pltpu.CompilerParams(dimension_semantics=("parallel",))

    if b is not None:
        b2 = b.reshape(1, N).astype(jnp.float32)
        return pl.pallas_call(
            _linear_bias_kernel,
            out_shape=out_shape,
            grid=grid,
            in_specs=[x_spec, w_spec, pl.BlockSpec((1, N), lambda i: (0, 0))],
            out_specs=o_spec,
            compiler_params=cparams,
        )(x, w_kn_bf16, b2)

    return pl.pallas_call(
        _linear_nobias_kernel,
        out_shape=out_shape,
        grid=grid,
        in_specs=[x_spec, w_spec],
        out_specs=o_spec,
        compiler_params=cparams,
    )(x, w_kn_bf16)


# ------------------------------------------------------------------
# Params (PyTorch nn.Linear-style init)
# ------------------------------------------------------------------

def init_linear_params(key, input_dimension, num_classes, bias=True):
    kw, kb = jax.random.split(key)
    bound = 1.0 / jnp.sqrt(float(input_dimension))
    # PyTorch layout (out, in) for reference; stored pre-transposed (in, out) in bf16
    # once at init so the per-call path has no transpose / cast / padding HBM copies.
    w_pt = jax.random.uniform(
        kw, (num_classes, input_dimension), jnp.float32, -bound, bound)
    w_kn = jnp.asarray(w_pt.T, jnp.bfloat16)
    b = None
    if bias:
        b = jax.random.uniform(kb, (num_classes,), jnp.float32, -bound, bound)
    return {"w_pt_f32": w_pt, "w_kn": w_kn, "b": b}


# ------------------------------------------------------------------
# Demo / smoke test
# ------------------------------------------------------------------

if __name__ == "__main__":
    batch = 16
    input_dimension = 64
    num_classes = 10

    key = jax.random.PRNGKey(0)
    k_x, k_p = jax.random.split(key)
    x = jax.random.normal(k_x, (batch, input_dimension), jnp.float32)
    params = init_linear_params(k_p, input_dimension, num_classes, bias=True)

    fwd = jax.jit(linear_forward)
    out = fwd(x, params["w_kn"], params["b"])
    out = jax.block_until_ready(out)

    assert out.shape == (batch, num_classes), out.shape
    assert bool(jnp.all(jnp.isfinite(out)))

    # Loose-tolerance reference check (bf16 MXU inputs vs pure-f32 reference).
    ref = x @ params["w_pt_f32"].T + params["b"]
    assert bool(jnp.allclose(out, ref, rtol=5e-2, atol=5e-2))

    print("KERNEL_OK")
</pallas_src>

<mosaic_0001>
module attributes {stable_mosaic.version = 11 : i64} {
  func.func @_linear_bias_kernel(%arg0: i32, %arg1: memref<8x64xf32, #tpu.memory_space<vmem>>, %arg2: memref<64x10xbf16, #tpu.memory_space<vmem>>, %arg3: memref<1x10xf32, #tpu.memory_space<vmem>>, %arg4: memref<8x10xf32, #tpu.memory_space<vmem>>) attributes {dimension_semantics = [#tpu.dimension_semantics<parallel>], iteration_bounds = array<i64: 2>, scalar_prefetch = 0 : i64, scratch_operands = 0 : i64, tpu.core_type = #tpu.core_type<tc>, window_params = [{transform_indices = @transform_0, window_bounds = array<i64: 8, 64>}, {pipeline_mode = #tpu.pipeline_mode<synchronous>, transform_indices = @transform_1, window_bounds = array<i64: 64, 10>}, {pipeline_mode = #tpu.pipeline_mode<synchronous>, transform_indices = @transform_2, window_bounds = array<i64: 1, 10>}, {transform_indices = @transform_3, window_bounds = array<i64: 8, 10>}]} {
    %c0 = arith.constant 0 : index
    %c0_0 = arith.constant 0 : index
    %0 = vector.load %arg1[%c0, %c0_0] : memref<8x64xf32, #tpu.memory_space<vmem>>, vector<8x64xf32>
    %1 = arith.truncf %0 : vector<8x64xf32> to vector<8x64xbf16>
    %c0_1 = arith.constant 0 : index
    %c0_2 = arith.constant 0 : index
    %2 = vector.load %arg2[%c0_1, %c0_2] : memref<64x10xbf16, #tpu.memory_space<vmem>>, vector<64x10xbf16>
    %cst = arith.constant dense<0.000000e+00> : vector<8x10xf32>
    %3 = tpu.matmul %1, %2, %cst {dimension_numbers = #tpu.dot_dimension_numbers<[1], [0], [0], [1], [0, 0, 1, 1], [], []>} : vector<8x64xbf16>, vector<64x10xbf16>, vector<8x10xf32> -> vector<8x10xf32>
    %c0_3 = arith.constant 0 : index
    %c0_4 = arith.constant 0 : index
    %4 = vector.load %arg3[%c0_3, %c0_4] : memref<1x10xf32, #tpu.memory_space<vmem>>, vector<1x10xf32>
    %5 = vector.broadcast %4 : vector<1x10xf32> to vector<8x10xf32>
    %6 = arith.addf %3, %5 : vector<8x10xf32>
    %c0_5 = arith.constant 0 : index
    %c0_6 = arith.constant 0 : index
    %7 = vector.load %arg4[%c0_5, %c0_6] : memref<8x10xf32, #tpu.memory_space<vmem>>, vector<8x10xf32>
    tpu.vector_store %arg4[%c0_5, %c0_6], %6 {strides = array<i32>} : memref<8x10xf32, #tpu.memory_space<vmem>>, vector<8x10xf32>,
    return
  }
  func.func @transform_0(%arg0: i32) -> (i32, i32) {
    %c0_i32 = arith.constant 0 : i32
    %c0_i32_0 = arith.constant 0 : i32
    return %arg0, %c0_i32 : i32, i32
  }
  func.func @transform_1(%arg0: i32) -> (i32, i32) {
    %c0_i32 = arith.constant 0 : i32
    %c0_i32_0 = arith.constant 0 : i32
    %c0_i32_1 = arith.constant 0 : i32
    return %c0_i32, %c0_i32_0 : i32, i32
  }
  func.func @transform_2(%arg0: i32) -> (i32, i32) {
    %c0_i32 = arith.constant 0 : i32
    %c0_i32_0 = arith.constant 0 : i32
    %c0_i32_1 = arith.constant 0 : i32
    return %c0_i32, %c0_i32_0 : i32, i32
  }
  func.func @transform_3(%arg0: i32) -> (i32, i32) {
    %c0_i32 = arith.constant 0 : i32
    %c0_i32_0 = arith.constant 0 : i32
    return %arg0, %c0_i32 : i32, i32
  }
}

</mosaic_0001>

<llo_original>
// kernel: linear_forward.1
$region0: #{linear_forward.1}
  #allocation0 [shape = 'u32[]', space=smem, size = 0x4, offset = 0x4, fixed_abs, tag = 'smem constant byte address 0x4 - core index']
  #allocation1 [shape = 'u32[144,128]{1,0:T(1,128)}', space=vmem, size = 0x12000, scoped, tag = 'internal scratch']
  %s0 = inlined_call_operand.vmem [shape: f32[16,64], index: 0, kind: input, shape index: {}]
  %s1 = inlined_call_operand.vmem [shape: bf16[64,10], index: 1, kind: input, shape index: {}]
  %s2 = inlined_call_operand.vmem [shape: f32[1,10], index: 2, kind: input, shape index: {}]
  %s3 = inlined_call_operand.hbm [shape: f32[16,10], index: 3, kind: output, shape index: {}]
  %s4 = sld [smem:[#allocation0]]
  $region45: #{linear_forward.1} parent=0
    _
  %s6 = ssub.s32 1, %s4
  %s7 = scalar_select 0, %s6, %s4
  $region1: #{linear_forward.1} parent=0
    #allocation2 [shape = 'u8[8192]{0}', space=vmem, size = 0x2000, scoped, tag = 'output window, operand 0']
    #allocation3 [shape = 's32[2]{0}', space=sflag, size = 0x8, scoped, tag = 'scoped memory for linear_forward.1']
    %8 = vsyncpa [#allocation3], 0
    %s9 = scalar_lea.sflag [#allocation3], 1
    %10 = vsyncpa %s9, 0
    loop: start=0, step=1, limit=4
    $region2: #{linear_forward.1} parent=1 // loop_pre_header
      _
    $region3: #{linear_forward.1} parent=1 // loop_header
      %s12 = sphi 0, %s16
      %p13 = scmp.ge.s32.totalorder %s12, 4
      %s22 = sphi 0, %s24
      %s25 = sphi 0, %s22
      %s26 = sphi 0, %s25
      %s42 = sphi 0, %s26
      %s46 = sphi 0, %s46
      %s48 = sphi 0, %s46
      %s49 = sphi 0, %s48
      %s63 = sphi 0, %s49
      %s67 = sphi 0, %s67
      %s69 = sphi 0, %s67
      %s70 = sphi 0, %s69
      %s84 = sphi 0, %s70
      %s90 = sphi 0, %s92
      %s93 = sphi 0, %s90
      %s94 = sphi 0, %s93
      %s110 = sphi 0, %s94
    $region4: #{linear_forward.1} parent=1 // loop_header_branch
      %15 = sbr.rel (%p13) target = $region8
    $region5: #{linear_forward.1} parent=1 // loop_body
      %s17 = ssub.s32 %s12, 1
      %s18 = ssub.s32 %s12, 2
      %s19 = sadd.s32 %s12, 1
      %s20 = ssub.s32 %s12, %s19
      %p21 = scmp.eq.s32.totalorder %s20, 0
      %s23 = sadd.s32 %s22, 1
      %s24 = scalar_select %p21, %s22, %s23
      %p27 = pneg %p21
      %p28 = scmp.eq.s32.totalorder %s12, 1
      %p29 = por %p27, %p28
      %p30 = scmp.ne.s32.totalorder %s22, %s25
      %p31 = scmp.eq.s32.totalorder %s12, 0
      %p32 = por %p30, %p31
      %p33 = scmp.ne.s32.totalorder %s22, %s25
      %p34 = scmp.eq.s32.totalorder %s17, 1
      %p35 = por %p33, %p34
      %p36 = scmp.ne.s32.totalorder %s25, %s26
      %p37 = scmp.eq.s32.totalorder %s17, 0
      %p38 = por %p36, %p37
      %p39 = scmp.ne.s32.totalorder %s25, %s26
      %p40 = scmp.eq.s32.totalorder %s18, 1
      %p41 = por %p39, %p40
      %p43 = scmp.ne.s32.totalorder %s26, %s42
      %p44 = scmp.eq.s32.totalorder %s18, 0
      %p45 = por %p43, %p44
      %s47 = sadd.s32 %s46, 1
      %p50 = scmp.eq.s32.totalorder %s12, 1
      %p51 = scmp.ne.s32.totalorder %s46, %s48
      %p52 = scmp.eq.s32.totalorder %s12, 0
      %p53 = por %p51, %p52
      %p54 = scmp.ne.s32.totalorder %s46, %s48
      %p55 = scmp.eq.s32.totalorder %s17, 1
      %p56 = por %p54, %p55
      %p57 = scmp.ne.s32.totalorder %s48, %s49
      %p58 = scmp.eq.s32.totalorder %s17, 0
      %p59 = por %p57, %p58
      %p60 = scmp.ne.s32.totalorder %s48, %s49
      %p61 = scmp.eq.s32.totalorder %s18, 1
      %p62 = por %p60, %p61
      %p64 = scmp.ne.s32.totalorder %s49, %s63
      %p65 = scmp.eq.s32.totalorder %s18, 0
      %p66 = por %p64, %p65
      %s68 = sadd.s32 %s67, 1
      %p71 = scmp.eq.s32.totalorder %s12, 1
      %p72 = scmp.ne.s32.totalorder %s67, %s69
      %p73 = scmp.eq.s32.totalorder %s12, 0
      %p74 = por %p72, %p73
      %p75 = scmp.ne.s32.totalorder %s67, %s69
      %p76 = scmp.eq.s32.totalorder %s17, 1
      %p77 = por %p75, %p76
      %p78 = scmp.ne.s32.totalorder %s69, %s70
      %p79 = scmp.eq.s32.totalorder %s17, 0
      %p80 = por %p78, %p79
      %p81 = scmp.ne.s32.totalorder %s69, %s70
      %p82 = scmp.eq.s32.totalorder %s18, 1
      %p83 = por %p81, %p82
      %p85 = scmp.ne.s32.totalorder %s70, %s84
      %p86 = scmp.eq.s32.totalorder %s18, 0
      %p87 = por %p85, %p86
      %s88 = ssub.s32 %s12, %s19
      %p89 = scmp.eq.s32.totalorder %s88, 0
      %s91 = sadd.s32 %s90, 1
      %s92 = scalar_select %p89, %s90, %s91
      %p95 = pneg %p89
      %p96 = scmp.eq.s32.totalorder %s12, 1
      %p97 = por %p95, %p96
      %p98 = scmp.ne.s32.totalorder %s90, %s93
      %p99 = scmp.eq.s32.totalorder %s12, 0
      %p100 = por %p98, %p99
      %p101 = scmp.ne.s32.totalorder %s90, %s93
      %p102 = scmp.eq.s32.totalorder %s17, 1
      %p103 = por %p101, %p102
      %p104 = scmp.ne.s32.totalorder %s93, %s94
      %p105 = scmp.eq.s32.totalorder %s17, 0
      %p106 = por %p104, %p105
      %p107 = scmp.ne.s32.totalorder %s93, %s94
      %p108 = scmp.eq.s32.totalorder %s18, 1
      %p109 = por %p107, %p108
      %p111 = scmp.ne.s32.totalorder %s94, %s110
      %p112 = scmp.eq.s32.totalorder %s18, 0
      %p113 = por %p111, %p112
      %p114 = scmp.le.s32.totalorder 1, %s12
      %p115 = scmp.lt.s32.totalorder %s12, 3
      %p116 = pnand %p114, %p115
      %p117 = pneg %p116
      // Predicated region
      $region9: #{linear_forward.1} parent=5 // pred_check
        _
      $region10: #{linear_forward.1} parent=5 // pred_check_branch
        %119 = sbr.rel (%p116) target = $region12
      $region11: #{linear_forward.1} parent=5 // pred_region
        %s120 = ssub.s32 %s12, 1
        // Predicated region
        $region13: #{linear_forward.1} parent=11 // pred_check
          %p121 = pneg %p59
        $region14: #{linear_forward.1} parent=11 // pred_check_branch
          %123 = sbr.rel (%p121) target = $region16
        $region15: #{linear_forward.1} parent=11 // pred_region
          _
        $region16: #{linear_forward.1} parent=11 // pred_fallthru
          _
        // Predicated region
        $region17: #{linear_forward.1} parent=11 // pred_check
          %p124 = pneg %p80
        $region18: #{linear_forward.1} parent=11 // pred_check_branch
          %126 = sbr.rel (%p124) target = $region20
        $region19: #{linear_forward.1} parent=11 // pred_region
          _
        $region20: #{linear_forward.1} parent=11 // pred_fallthru
          _
      $region12: #{linear_forward.1} parent=5 // pred_fallthru
        _
      %p127 = scmp.lt.s32.totalorder %s12, 2
      // Predicated region
      $region21: #{linear_forward.1} parent=5 // pred_check
        %p128 = pneg %p127
      $region22: #{linear_forward.1} parent=5 // pred_check_branch
        %130 = sbr.rel (%p128) target = $region24
      $region23: #{linear_forward.1} parent=5 // pred_region
        // Predicated region
        $region25: #{linear_forward.1} parent=23 // pred_check
          %p131 = pneg %p32
        $region26: #{linear_forward.1} parent=23 // pred_check_branch
          %133 = sbr.rel (%p131) target = $region28
        $region27: #{linear_forward.1} parent=23 // pred_region
          %p134 = scmp.lt.s32.totalorder %s12, 1
          %s135 = scalar_select %p134, %s12, 1
          %s136 = smul.addr %s135, 8
          %s137 = scalar_lea.vmem %s0, %s136
        $region28: #{linear_forward.1} parent=23 // pred_fallthru
          _
      $region24: #{linear_forward.1} parent=5 // pred_fallthru
        _
      %p138 = scmp.le.s32.totalorder 1, %s12
      %p139 = scmp.lt.s32.totalorder %s12, 3
      %p140 = pnand %p138, %p139
      %p141 = pneg %p140
      // Predicated region
      $region29: #{linear_forward.1} parent=5 // pred_check
        _
      $region30: #{linear_forward.1} parent=5 // pred_check_branch
        %143 = sbr.rel (%p140) target = $region32
      $region31: #{linear_forward.1} parent=5 // pred_region
        %s144 = ssub.s32 %s12, 1
        %p145 = scmp.lt.s32.totalorder %s17, 1
        %s146 = scalar_select %p145, %s17, 1
        %s147 = smul.addr %s146, 8
        %s148 = scalar_lea.vmem %s0, %s147
        %p149 = pneg %p38
        %p150 = pneg %p35
        %p151 = pneg %p59
        %p152 = pneg %p56
        %p153 = pneg %p80
        %p154 = pneg %p77
        %p155 = pneg %p106
        %p156 = pneg %p103
        %s157 = sand.u32 %s93, 1
        %s158 = scalar_lea.sflag [#allocation3], %s157
        %s159 = sand.u32 %s93, 1
        %s160 = smul.addr %s159, 8
        %s161 = scalar_lea.vmem [#allocation2], %s160
        %p162 = scmp.lt.s32.totalorder %s17, 1
        %s163 = scalar_select %p162, %s17, 1
        %s164 = smul.addr %s163, 8
        %s165 = scalar_lea.vmem %s0, %s164
        %v167 = vld [vmem:[%s165] sm:$0xff]
        %v168 = vpack.c.bf16 %v167, %v167
        %v169 = vld [vmem:[%s1] sm:$0xf]
        %v170 = vld [vmem:[%s1 + $0x4] sm:$0xf]
        %v171 = vld [vmem:[%s1 + $0x8] sm:$0xf]
        %v172 = vld [vmem:[%s1 + $0xc] sm:$0xf]
        %v173 = vld [vmem:[%s1 + $0x10] sm:$0xf]
        %v174 = vld [vmem:[%s1 + $0x14] sm:$0xf]
        %v175 = vld [vmem:[%s1 + $0x18] sm:$0xf]
        %v176 = vld [vmem:[%s1 + $0x1c] sm:$0xf]
        %v177 = vld [vmem:[%s2] sm:$0x1]
        %v179 = vlaneseq
        %v180 = vshrl.u32 %v179, 7
        %v181 = vsub.s32 0, %v180
        %v182 = vrot.slane %v177, %v181
        %v192 = vunpack.c.l.b16 %v169
        %v193 = vunpack.c.l.b16 %v170
        %v194 = vunpack.c.l.b16 %v171
        %v195 = vunpack.c.l.b16 %v172
        %v196 = vunpack.c.l.b16 %v173
        %v197 = vunpack.c.l.b16 %v174
        %v198 = vunpack.c.l.b16 %v175
        %v199 = vunpack.c.l.b16 %v176
        %v200 = vpack.c.b16 %v193, %v192
        %v201 = vpack.c.b16 %v195, %v194
        %v202 = vpack.c.b16 %v197, %v196
        %v203 = vpack.c.b16 %v199, %v198
        %vm208 = vcmask 523264
        %v210 = vsel %vm208, %v168, 0
        %212 = vmatprep.subr.bf16.mxu0 0
        %213 = vmatpush1.bf16.msra.mxu0 0
        %214 = vmatprep.subr.bf16.mxu0 0
        %215 = vmatpush1.bf16.msra.mxu0 0
        %216 = vmatprep.subr.bf16.mxu0 0
        %217 = vmatpush1.bf16.msra.mxu0 0
        %218 = vmatprep.subr.bf16.mxu0 0
        %219 = vmatpush1.bf16.msra.mxu0 0
        %220 = vmatprep.subr.bf16.mxu0 0
        %221 = vmatpush1.bf16.msra.mxu0 %v203
        %222 = vmatprep.subr.bf16.mxu0 0
        %223 = vmatpush1.bf16.msra.mxu0 %v202
        %224 = vmatprep.subr.bf16.mxu0 0
        %225 = vmatpush1.bf16.msra.mxu0 %v201
        %226 = vmatprep.subr.bf16.mxu0 0
        %227 = vmatpush1.bf16.msra.mxu0 %v200
        %228 = vmatprep.subr.bf16.mxu0 0
        %229 = vmatpush2.bf16.msra.mxu0 0
        %230 = vmatprep.subr.bf16.mxu0 0
        %231 = vmatpush2.bf16.msra.mxu0 0
        %232 = vmatprep.subr.bf16.mxu0 0
        %233 = vmatpush2.bf16.msra.mxu0 0
        %234 = vmatprep.subr.bf16.mxu0 0
        %235 = vmatpush2.bf16.msra.mxu0 0
        %236 = vmatprep.subr.bf16.mxu0 0
        %237 = vmatpush2.bf16.msra.mxu0 0
        %238 = vmatprep.subr.bf16.mxu0 0
        %239 = vmatpush2.bf16.msra.mxu0 0
        %240 = vmatprep.subr.bf16.mxu0 0
        %241 = vmatpush2.bf16.msra.mxu0 0
        %242 = vmatprep.subr.bf16.mxu0 0
        %243 = vmatpush2.bf16.msra.mxu0 0
        %244 = vmatprep.mubr.bf16.mxu0 0
        %245 = vmatmul.mubr.bf16.gmra.mxu0 %v210
        %v246 = vpop.f32.mrf.mxu0
        %v247 = vadd.f32 %v182, %v246
        %v248 = vpop.f32.mrf.mxu0
        %v249 = vpop.f32.mrf.mxu0
        %v250 = vpop.f32.mrf.mxu0
        %251 = vdwg.mxu0
        %vm252 = vcmask 80896
        %253 = vst.msk [vmem:[%s161] sm:$0xff] %vm252, %v247
        %s254 = sand.u32 %s93, 1
        %s255 = scalar_lea.sflag [#allocation3], %s254
        %s256 = sand.u32 %s93, 1
        %s257 = smul.addr %s256, 8
        %s258 = scalar_lea.vmem [#allocation2], %s257
        // Predicated region
        $region33: #{linear_forward.1} parent=31 // pred_check
          %p259 = pneg %p103
        $region34: #{linear_forward.1} parent=31 // pred_check_branch
          %261 = sbr.rel (%p259) target = $region36
        $region35: #{linear_forward.1} parent=31 // pred_region
          %s263 = ssub.s32 128, 128
          %264 = vsyncadd %s255, %s263
          %s265 = smul.addr %s17, 128
          %s266 = scalar_lea.hbm %s3, %s265
          %s268 = sshll.u32 %s258, 4
          %s269 = int_to_ptr.vmem [resolvable:$true] %s268
          %271 = dma.vmem_to_hbm [thread:$0]  %s269, 128, %s266, %s255
        $region36: #{linear_forward.1} parent=31 // pred_fallthru
          _
      $region32: #{linear_forward.1} parent=5 // pred_fallthru
        _
      %p272 = scmp.le.s32.totalorder 2, %s12
      // Predicated region
      $region37: #{linear_forward.1} parent=5 // pred_check
        %p273 = pneg %p272
      $region38: #{linear_forward.1} parent=5 // pred_check_branch
        %275 = sbr.rel (%p273) target = $region40
      $region39: #{linear_forward.1} parent=5 // pred_region
        %s276 = ssub.s32 %s12, 2
        // Predicated region
        $region41: #{linear_forward.1} parent=39 // pred_check
          %p277 = pneg %p109
        $region42: #{linear_forward.1} parent=39 // pred_check_branch
          %279 = sbr.rel (%p277) target = $region44
        $region43: #{linear_forward.1} parent=39 // pred_region
          %s280 = sand.u32 %s94, 1
          %s281 = scalar_lea.sflag [#allocation3], %s280
          %s282 = sand.u32 %s94, 1
          %s283 = smul.addr %s282, 8
          %s284 = scalar_lea.vmem [#allocation2], %s283
          %285 = dma.done %s281, 128
        $region44: #{linear_forward.1} parent=39 // pred_fallthru
          _
      $region40: #{linear_forward.1} parent=5 // pred_fallthru
        _
    $region6: #{linear_forward.1} parent=1 // loop_footer
      %s16 = sadd.s32 1, %s12
    $region7: #{linear_forward.1} parent=1 // loop_footer_branch
      %11 = sbr.rel target = $region3
    $region8: #{linear_forward.1} parent=1 // loop_exit
      _
    %286 = vsyncpa [#allocation3], 1
    %s287 = scalar_lea.sflag [#allocation3], 1
    %288 = vsyncpa %s287, 1

</llo_original>
